<compile_context>
chip_gen: v7x
topology: tpu7x:2x2x1
jax: 0.10.0
libtpu: 0.0.40
codegen_flags: <defaults>
</compile_context>

<pallas_src>
import functools

import numpy as np

import jax
import jax.numpy as jnp
from jax.experimental import pallas as pl
from jax.experimental.pallas import tpu as pltpu


# ----------------------------------------------------------------------------
# Fused kernel: ComplexConv2d (kxk, 'same') + GroupNorm(2*Cout, 2*Cout) + ReLU
# for `nb` samples per grid step (grid iterates over the batch).
# ----------------------------------------------------------------------------
def _complex_conv_gn_relu_kernel(x_ref, w_ref, m_ref, g_ref, b_ref, o_ref, col_ref,
                                 *, nb, H, W, k, eps):
    """
    x_ref   : (nb, 2*Cin, H*W)      f32, channels = [re | im], spatial flattened (lane axis)
    w_ref   : (2*Cout, k*k*2*Cin)   block-form complex weights (tap-major K), matmul dtype
    m_ref   : (k*k, H*W)            per-tap 'same'-padding validity masks (1.0 / 0.0)
    g_ref   : (2*Cout, 1)           GroupNorm weight (gamma)
    b_ref   : (2*Cout, 1)           GroupNorm bias (beta)
    o_ref   : (nb, 2*Cout, H*W)     fused output block (lane-dense: H*W on the lane axis)
    col_ref : (k*k*2*Cin, nb*H*W)   VMEM im2col scratch (matmul dtype)
    """
    HW = H * W
    C2in = x_ref.shape[1]
    p = k // 2

    # ---- build the im2col slab in VMEM ------------------------------------------------
    # Tap (ky, kx) needs x[c, h+ky-p, w+kx-p]; on the flat spatial (lane) axis that is a
    # lane roll by (ky-p)*W + (kx-p), with out-of-image pixels zeroed by a precomputed
    # mask (this is the 'same' zero padding -- no padded HBM copy, no in-kernel reshapes).
    for s in range(nb):
        xs = x_ref[s]                                            # (2*Cin, H*W) f32
        taps = []
        for t in range(k * k):
            ky, kx = divmod(t, k)
            off = (ky - p) * W + (kx - p)
            if off == 0:
                taps.append(xs)                                  # center tap: no shift, no mask
            else:
                shifted = pltpu.roll(xs, shift=(-off) % HW, axis=1)   # result[q] = xs[q + off]
                taps.append(shifted * m_ref[t:t + 1, :])
        col = jnp.concatenate(taps, axis=0)                      # (k*k*2*Cin, H*W) f32
        col_ref[:, s * HW:(s + 1) * HW] = col.astype(col_ref.dtype)

    # ---- ONE big-K MXU matmul: (2*Cout, K) @ (K, nb*H*W), f32 accumulation -------------
    y = jnp.dot(w_ref[...], col_ref[...], preferred_element_type=jnp.float32)

    # NOTE: the conv bias (b_re -/+ b_im) is intentionally omitted here: GroupNorm subtracts
    # the per-sample per-channel mean, which cancels any per-channel constant exactly.

    # ---- GroupNorm(num_groups == num_channels) + affine + ReLU, per sample -------------
    for s in range(nb):
        ys = y[:, s * HW:(s + 1) * HW]                           # (2*Cout, H*W)
        mean = jnp.mean(ys, axis=1, keepdims=True)
        c = ys - mean
        var = jnp.mean(c * c, axis=1, keepdims=True)             # biased variance
        scale = g_ref[...] * jax.lax.rsqrt(var + eps)            # fold gamma into one scale
        o_ref[s] = jnp.maximum(c * scale + b_ref[...], 0.0)      # single FMA + ReLU + store


# ----------------------------------------------------------------------------
# Module: ComplexConvBlock (default use_bn=2: GroupNorm(2*Cout, 2*Cout))
# ----------------------------------------------------------------------------
class ComplexConvBlockPallas:

    def __init__(self, input_dim, output_dim, kernel_size=3, use_bn=2,
                 use_bf16_matmul=True, samples_per_step=None, key=None):
        if use_bn != 2:
            # TODO(synk): use_bn=1 (BatchNorm2d, cross-sample stats), use_bn=3
            # (ComplexInstanceNorm2d) and convFT=1 (Conv2dFT) paths are not implemented.
            raise NotImplementedError("only the default use_bn=2 (GroupNorm) path is implemented")
        self.input_dim = int(input_dim)
        self.output_dim = int(output_dim)
        self.k = int(kernel_size)
        self.eps = 1e-5
        self.matmul_dtype = jnp.bfloat16 if use_bf16_matmul else jnp.float32
        self.samples_per_step = samples_per_step   # None -> auto-pick under a VMEM budget

        if key is None:
            key = jax.random.PRNGKey(42)
        ks = jax.random.split(key, 6)
        s = 0.1
        k_, Cin, Cout = self.k, self.input_dim, self.output_dim
        # ComplexConv2d == two real Conv2d(Cin, Cout, k, padding=k//2), each with its own bias.
        self.w_re = s * jax.random.normal(ks[0], (Cout, Cin, k_, k_), jnp.float32)
        self.w_im = s * jax.random.normal(ks[1], (Cout, Cin, k_, k_), jnp.float32)
        self.b_re = s * jax.random.normal(ks[2], (Cout,), jnp.float32)
        self.b_im = s * jax.random.normal(ks[3], (Cout,), jnp.float32)
        # GroupNorm(2*Cout, 2*Cout) affine params. PyTorch default init is ones/zeros; they are
        # perturbed here only so the affine path is actually exercised by the numeric check.
        self.gamma = 1.0 + 0.05 * jax.random.normal(ks[4], (2 * Cout,), jnp.float32)
        self.beta = 0.05 * jax.random.normal(ks[5], (2 * Cout,), jnp.float32)

        # ---- Pack the block-form complex weight for ONE big-K matmul ----
        #   rows = output channels [re | im] (2*Cout)
        #   cols = (tap ky,kx)-major, then input channels [re | im]  (k*k*2*Cin)
        #   real_out = conv(w_re, x_re) - conv(w_im, x_im)
        #   imag_out = conv(w_im, x_re) + conv(w_re, x_im)
        wr = jnp.transpose(self.w_re, (0, 2, 3, 1))      # (Cout, k, k, Cin)
        wi = jnp.transpose(self.w_im, (0, 2, 3, 1))
        top = jnp.concatenate([wr, -wi], axis=-1)        # real-output rows
        bot = jnp.concatenate([wi, wr], axis=-1)         # imag-output rows
        w2 = jnp.concatenate([top, bot], axis=0)         # (2*Cout, k, k, 2*Cin)
        self.w2 = w2.reshape(2 * Cout, k_ * k_ * 2 * Cin).astype(self.matmul_dtype)

        # NOTE: the effective conv bias (b_re -/+ b_im) is NOT passed to the kernel; GroupNorm's
        # mean subtraction cancels it exactly (the reference below includes it and still matches).
        self.gamma2 = self.gamma.reshape(2 * Cout, 1)
        self.beta2 = self.beta.reshape(2 * Cout, 1)

    # ---- choose how many samples to fuse per grid step (VMEM-budgeted) ----
    def _pick_samples_per_step(self, N, C2in, C2out, HW):
        itemsize = np.dtype(self.matmul_dtype).itemsize
        k2 = self.k * self.k

        def step_bytes(nb):
            return (2 * nb * C2in * HW * 4              # double-buffered f32 input blocks
                    + 2 * nb * C2out * HW * 4           # double-buffered f32 output blocks
                    + k2 * C2in * nb * HW * itemsize)   # im2col VMEM scratch

        budget = 8 << 20   # leave headroom under the 32 MiB scoped-VMEM limit (v7x: 64 MiB phys)
        best = 1
        for nb in range(1, N + 1):
            if N % nb:
                continue
            if N >= 2 and N // nb < 2:
                continue   # keep >= 2 grid steps so the 'parallel' batch axis can shard on v7x
            if step_bytes(nb) <= budget:
                best = nb
        return best

    @functools.partial(jax.jit, static_argnums=0)
    def __call__(self, x):
        # x: (N, 2, Cin, H, W) float32
        N, two, Cin, H, W = x.shape
        assert two == 2 and Cin == self.input_dim
        k = self.k
        p = k // 2
        Cout = self.output_dim
        C2in, C2out = 2 * Cin, 2 * Cout
        HW = H * W

        # Free reshape only: [re|im] channels first, spatial flattened on the minor (lane) axis.
        # No HBM-side transpose, pad or dtype cast on the activation path.
        xf = x.reshape(N, C2in, HW)

        # Per-tap 'same'-padding validity masks over the flat spatial axis (trace-time constants).
        hh, ww = np.meshgrid(np.arange(H), np.arange(W), indexing="ij")
        masks_np = np.empty((k * k, HW), np.float32)
        for t in range(k * k):
            dy, dx = t // k - p, t % k - p
            valid = (hh + dy >= 0) & (hh + dy < H) & (ww + dx >= 0) & (ww + dx < W)
            masks_np[t] = valid.reshape(-1).astype(np.float32)
        masks = jnp.asarray(masks_np)

        nb = self.samples_per_step or self._pick_samples_per_step(N, C2in, C2out, HW)
        assert N % nb == 0, (N, nb)

        kernel = functools.partial(_complex_conv_gn_relu_kernel,
                                   nb=nb, H=H, W=W, k=k, eps=self.eps)

        # TODO(synk): for very large H*W the per-sample slab needs spatial row tiling with a
        # two-pass GroupNorm (stats pass, then normalize pass), and a second "parallel" grid
        # axis so v7x's two TensorCores both have work when N is small/odd.  Not needed at
        # these block sizes (per-step residency is a few hundred KiB).
        y = pl.pallas_call(
            kernel,
            out_shape=jax.ShapeDtypeStruct((N, C2out, HW), jnp.float32),
            grid_spec=pltpu.PrefetchScalarGridSpec(
                num_scalar_prefetch=0,
                grid=(N // nb,),
                in_specs=[
                    pl.BlockSpec((nb, C2in, HW), lambda i: (i, 0, 0)),
                    pl.BlockSpec((C2out, k * k * C2in), lambda i: (0, 0)),
                    pl.BlockSpec((k * k, HW), lambda i: (0, 0)),
                    pl.BlockSpec((C2out, 1), lambda i: (0, 0)),
                    pl.BlockSpec((C2out, 1), lambda i: (0, 0)),
                ],
                out_specs=pl.BlockSpec((nb, C2out, HW), lambda i: (i, 0, 0)),
                scratch_shapes=[pltpu.VMEM((k * k * C2in, nb * HW), self.matmul_dtype)],
            ),
            compiler_params=pltpu.CompilerParams(
                dimension_semantics=("parallel",),
                vmem_limit_bytes=32 * 1024 * 1024,
            ),
        )(xf, self.w2, masks, self.gamma2, self.beta2)

        # (N, 2*Cout, H*W) -> (N, 2, Cout, H, W): pure reshape, no transpose on the output path.
        return y.reshape(N, 2, Cout, H, W)


# ----------------------------------------------------------------------------
# Pure-JAX reference (for the sanity check in __main__)
# ----------------------------------------------------------------------------
def _reference_forward(x, w_re, w_im, b_re, b_im, gamma, beta, eps=1e-5):
    xr, xi = x[:, 0], x[:, 1]
    dn = ("NCHW", "OIHW", "NCHW")
    p = w_re.shape[-1] // 2
    pad = [(p, p), (p, p)]

    def conv(z, w, b):
        y = jax.lax.conv_general_dilated(z, w, (1, 1), pad, dimension_numbers=dn,
                                         precision=jax.lax.Precision.HIGHEST)
        return y + b[None, :, None, None]

    real = conv(xr, w_re, b_re) - conv(xi, w_im, b_im)
    imag = conv(xi, w_re, b_re) + conv(xr, w_im, b_im)
    y = jnp.concatenate([real, imag], axis=1)                      # (N, 2*Cout, H, W)
    mean = jnp.mean(y, axis=(2, 3), keepdims=True)
    var = jnp.mean((y - mean) ** 2, axis=(2, 3), keepdims=True)
    y = (y - mean) * jax.lax.rsqrt(var + eps)
    y = y * gamma[None, :, None, None] + beta[None, :, None, None]
    y = jnp.maximum(y, 0.0)
    N, C2, H, W = y.shape
    return y.reshape(N, 2, C2 // 2, H, W)


if __name__ == "__main__":
    key = jax.random.PRNGKey(0)
    k_x, k_p = jax.random.split(key)

    N, input_dim, output_dim, H, W = 2, 4, 8, 16, 16
    x = jax.random.normal(k_x, (N, 2, input_dim, H, W), jnp.float32)

    # Default path: bf16 MXU operands, f32 accumulation, f32 GroupNorm/ReLU epilogue.
    block = ComplexConvBlockPallas(input_dim, output_dim, kernel_size=3, use_bn=2, key=k_p)
    out = jax.block_until_ready(block(x))
    assert out.shape == (N, 2, output_dim, H, W), out.shape
    assert out.dtype == jnp.float32
    assert bool(jnp.all(out >= 0.0))                       # post-ReLU

    ref = _reference_forward(x, block.w_re, block.w_im, block.b_re, block.b_im,
                             block.gamma, block.beta)
    # bf16 operand quantization over a K=k*k*2*Cin contraction followed by per-channel
    # normalization -> keep a loose absolute tolerance for the bf16-MXU path.
    err_bf16 = float(jnp.max(jnp.abs(out - ref)))
    assert err_bf16 < 5e-2, f"bf16-MXU path: max abs error vs reference = {err_bf16}"

    # f32 path (same parameters): tighter check that the layout refactor kept the numerics.
    block32 = ComplexConvBlockPallas(input_dim, output_dim, kernel_size=3, use_bn=2,
                                     use_bf16_matmul=False, key=k_p)
    out32 = jax.block_until_ready(block32(x))
    err_f32 = float(jnp.max(jnp.abs(out32 - ref)))
    assert err_f32 < 3e-2, f"f32-MXU path: max abs error vs reference = {err_f32}"

    print("KERNEL_OK")
</pallas_src>

<mosaic_0001>
module attributes {stable_mosaic.version = 11 : i64} {
  func.func @_complex_conv_gn_relu_kernel(%arg0: i32, %arg1: memref<1x8x256xf32, #tpu.memory_space<vmem>>, %arg2: memref<16x72xbf16, #tpu.memory_space<vmem>>, %arg3: memref<9x256xf32, #tpu.memory_space<vmem>>, %arg4: memref<16x1xf32, #tpu.memory_space<vmem>>, %arg5: memref<16x1xf32, #tpu.memory_space<vmem>>, %arg6: memref<1x16x256xf32, #tpu.memory_space<vmem>>, %arg7: memref<72x256xbf16, #tpu.memory_space<vmem>>) attributes {dimension_semantics = [#tpu.dimension_semantics<parallel>], iteration_bounds = array<i64: 2>, scalar_prefetch = 0 : i64, scratch_operands = 1 : i64, tpu.core_type = #tpu.core_type<tc>, window_params = [{transform_indices = @transform_0, window_bounds = array<i64: 1, 8, 256>}, {pipeline_mode = #tpu.pipeline_mode<synchronous>, transform_indices = @transform_1, window_bounds = array<i64: 16, 72>}, {pipeline_mode = #tpu.pipeline_mode<synchronous>, transform_indices = @transform_2, window_bounds = array<i64: 9, 256>}, {pipeline_mode = #tpu.pipeline_mode<synchronous>, transform_indices = @transform_3, window_bounds = array<i64: 16, 1>}, {pipeline_mode = #tpu.pipeline_mode<synchronous>, transform_indices = @transform_4, window_bounds = array<i64: 16, 1>}, {transform_indices = @transform_5, window_bounds = array<i64: 1, 16, 256>}]} {
    %c0 = arith.constant 0 : index
    %c0_0 = arith.constant 0 : index
    %c0_1 = arith.constant 0 : index
    %0 = vector.load %arg1[%c0, %c0_0, %c0_1] : memref<1x8x256xf32, #tpu.memory_space<vmem>>, vector<1x8x256xf32>
    %1 = vector.shape_cast %0 : vector<1x8x256xf32> to vector<8x256xf32>
    %c17_i32 = arith.constant 17 : i32
    %2 = tpu.dynamic_rotate %1 by %c17_i32 dim 1 : vector<8x256xf32>, i32 -> vector<8x256xf32>
    %c0_2 = arith.constant 0 : index
    %c0_3 = arith.constant 0 : index
    %3 = vector.load %arg3[%c0_2, %c0_3] : memref<9x256xf32, #tpu.memory_space<vmem>>, vector<1x256xf32>
    %4 = vector.broadcast %3 : vector<1x256xf32> to vector<8x256xf32>
    %5 = arith.mulf %2, %4 : vector<8x256xf32>
    %c16_i32 = arith.constant 16 : i32
    %6 = tpu.dynamic_rotate %1 by %c16_i32 dim 1 : vector<8x256xf32>, i32 -> vector<8x256xf32>
    %c1 = arith.constant 1 : index
    %c0_4 = arith.constant 0 : index
    %7 = vector.load %arg3[%c1, %c0_4] : memref<9x256xf32, #tpu.memory_space<vmem>>, vector<1x256xf32>
    %8 = vector.broadcast %7 : vector<1x256xf32> to vector<8x256xf32>
    %9 = arith.mulf %6, %8 : vector<8x256xf32>
    %c15_i32 = arith.constant 15 : i32
    %10 = tpu.dynamic_rotate %1 by %c15_i32 dim 1 : vector<8x256xf32>, i32 -> vector<8x256xf32>
    %c2 = arith.constant 2 : index
    %c0_5 = arith.constant 0 : index
    %11 = vector.load %arg3[%c2, %c0_5] : memref<9x256xf32, #tpu.memory_space<vmem>>, vector<1x256xf32>
    %12 = vector.broadcast %11 : vector<1x256xf32> to vector<8x256xf32>
    %13 = arith.mulf %10, %12 : vector<8x256xf32>
    %c1_i32 = arith.constant 1 : i32
    %14 = tpu.dynamic_rotate %1 by %c1_i32 dim 1 : vector<8x256xf32>, i32 -> vector<8x256xf32>
    %c3 = arith.constant 3 : index
    %c0_6 = arith.constant 0 : index
    %15 = vector.load %arg3[%c3, %c0_6] : memref<9x256xf32, #tpu.memory_space<vmem>>, vector<1x256xf32>
    %16 = vector.broadcast %15 : vector<1x256xf32> to vector<8x256xf32>
    %17 = arith.mulf %14, %16 : vector<8x256xf32>
    %c255_i32 = arith.constant 255 : i32
    %18 = tpu.dynamic_rotate %1 by %c255_i32 dim 1 : vector<8x256xf32>, i32 -> vector<8x256xf32>
    %c5 = arith.constant 5 : index
    %c0_7 = arith.constant 0 : index
    %19 = vector.load %arg3[%c5, %c0_7] : memref<9x256xf32, #tpu.memory_space<vmem>>, vector<1x256xf32>
    %20 = vector.broadcast %19 : vector<1x256xf32> to vector<8x256xf32>
    %21 = arith.mulf %18, %20 : vector<8x256xf32>
    %c241_i32 = arith.constant 241 : i32
    %22 = tpu.dynamic_rotate %1 by %c241_i32 dim 1 : vector<8x256xf32>, i32 -> vector<8x256xf32>
    %c6 = arith.constant 6 : index
    %c0_8 = arith.constant 0 : index
    %23 = vector.load %arg3[%c6, %c0_8] : memref<9x256xf32, #tpu.memory_space<vmem>>, vector<1x256xf32>
    %24 = vector.broadcast %23 : vector<1x256xf32> to vector<8x256xf32>
    %25 = arith.mulf %22, %24 : vector<8x256xf32>
    %c240_i32 = arith.constant 240 : i32
    %26 = tpu.dynamic_rotate %1 by %c240_i32 dim 1 : vector<8x256xf32>, i32 -> vector<8x256xf32>
    %c7 = arith.constant 7 : index
    %c0_9 = arith.constant 0 : index
    %27 = vector.load %arg3[%c7, %c0_9] : memref<9x256xf32, #tpu.memory_space<vmem>>, vector<1x256xf32>
    %28 = vector.broadcast %27 : vector<1x256xf32> to vector<8x256xf32>
    %29 = arith.mulf %26, %28 : vector<8x256xf32>
    %c239_i32 = arith.constant 239 : i32
    %30 = tpu.dynamic_rotate %1 by %c239_i32 dim 1 : vector<8x256xf32>, i32 -> vector<8x256xf32>
    %c8 = arith.constant 8 : index
    %c0_10 = arith.constant 0 : index
    %31 = vector.load %arg3[%c8, %c0_10] : memref<9x256xf32, #tpu.memory_space<vmem>>, vector<1x256xf32>
    %32 = vector.broadcast %31 : vector<1x256xf32> to vector<8x256xf32>
    %33 = arith.mulf %30, %32 : vector<8x256xf32>
    %34 = tpu.concatenate %5, %9, %13, %17, %1, %21, %25, %29, %33 in 0 : vector<8x256xf32>, vector<8x256xf32>, vector<8x256xf32>, vector<8x256xf32>, vector<8x256xf32>, vector<8x256xf32>, vector<8x256xf32>, vector<8x256xf32>, vector<8x256xf32> -> vector<72x256xf32>
    %35 = arith.truncf %34 : vector<72x256xf32> to vector<72x256xbf16>
    %c0_11 = arith.constant 0 : index
    %c0_12 = arith.constant 0 : index
    %36 = vector.load %arg7[%c0_11, %c0_12] : memref<72x256xbf16, #tpu.memory_space<vmem>>, vector<72x256xbf16>
    tpu.vector_store %arg7[%c0_11, %c0_12], %35 {strides = array<i32>} : memref<72x256xbf16, #tpu.memory_space<vmem>>, vector<72x256xbf16>,
    %c0_13 = arith.constant 0 : index
    %c0_14 = arith.constant 0 : index
    %37 = vector.load %arg2[%c0_13, %c0_14] : memref<16x72xbf16, #tpu.memory_space<vmem>>, vector<16x72xbf16>
    %c0_15 = arith.constant 0 : index
    %c0_16 = arith.constant 0 : index
    %38 = vector.load %arg7[%c0_15, %c0_16] : memref<72x256xbf16, #tpu.memory_space<vmem>>, vector<72x256xbf16>
    %cst = arith.constant dense<0.000000e+00> : vector<16x256xf32>
    %39 = tpu.matmul %37, %38, %cst {dimension_numbers = #tpu.dot_dimension_numbers<[1], [0], [0], [1], [0, 0, 1, 1], [], []>} : vector<16x72xbf16>, vector<72x256xbf16>, vector<16x256xf32> -> vector<16x256xf32>
    %cst_17 = arith.constant dense<0.000000e+00> : vector<16xf32>
    %40 = vector.multi_reduction <add>, %39, %cst_17 [1] : vector<16x256xf32> to vector<16xf32>
    %41 = vector.shape_cast %40 : vector<16xf32> to vector<16x1xf32>
    %cst_18 = arith.constant 2.560000e+02 : f32
    %42 = vector.broadcast %cst_18 : f32 to vector<16x1xf32>
    %43 = arith.divf %41, %42 : vector<16x1xf32>
    %44 = vector.broadcast %43 : vector<16x1xf32> to vector<16x256xf32>
    %45 = arith.subf %39, %44 : vector<16x256xf32>
    %46 = arith.mulf %45, %45 : vector<16x256xf32>
    %cst_19 = arith.constant dense<0.000000e+00> : vector<16xf32>
    %47 = vector.multi_reduction <add>, %46, %cst_19 [1] : vector<16x256xf32> to vector<16xf32>
    %48 = vector.shape_cast %47 : vector<16xf32> to vector<16x1xf32>
    %cst_20 = arith.constant 2.560000e+02 : f32
    %49 = vector.broadcast %cst_20 : f32 to vector<16x1xf32>
    %50 = arith.divf %48, %49 : vector<16x1xf32>
    %c0_21 = arith.constant 0 : index
    %c0_22 = arith.constant 0 : index
    %51 = vector.load %arg4[%c0_21, %c0_22] : memref<16x1xf32, #tpu.memory_space<vmem>>, vector<16x1xf32>
    %cst_23 = arith.constant 9.99999974E-6 : f32
    %52 = vector.broadcast %cst_23 : f32 to vector<16x1xf32>
    %53 = arith.addf %50, %52 : vector<16x1xf32>
    %54 = math.rsqrt %53 : vector<16x1xf32>
    %55 = arith.mulf %51, %54 : vector<16x1xf32>
    %56 = vector.broadcast %55 : vector<16x1xf32> to vector<16x256xf32>
    %57 = arith.mulf %45, %56 : vector<16x256xf32>
    %c0_24 = arith.constant 0 : index
    %c0_25 = arith.constant 0 : index
    %58 = vector.load %arg5[%c0_24, %c0_25] : memref<16x1xf32, #tpu.memory_space<vmem>>, vector<16x1xf32>
    %59 = vector.broadcast %58 : vector<16x1xf32> to vector<16x256xf32>
    %60 = arith.addf %57, %59 : vector<16x256xf32>
    %cst_26 = arith.constant 0.000000e+00 : f32
    %61 = vector.broadcast %cst_26 : f32 to vector<16x256xf32>
    %62 = arith.maximumf %60, %61 : vector<16x256xf32>
    %c0_27 = arith.constant 0 : index
    %c0_28 = arith.constant 0 : index
    %c0_29 = arith.constant 0 : index
    %63 = vector.load %arg6[%c0_27, %c0_28, %c0_29] : memref<1x16x256xf32, #tpu.memory_space<vmem>>, vector<1x16x256xf32>
    %64 = vector.shape_cast %63 : vector<1x16x256xf32> to vector<16x256xf32>
    %65 = vector.shape_cast %62 : vector<16x256xf32> to vector<1x16x256xf32>
    tpu.vector_store %arg6[%c0_27, %c0_28, %c0_29], %65 {strides = array<i32>} : memref<1x16x256xf32, #tpu.memory_space<vmem>>, vector<1x16x256xf32>,
    return
  }
  func.func @transform_0(%arg0: i32) -> (i32, i32, i32) {
    %c0_i32 = arith.constant 0 : i32
    %c0_i32_0 = arith.constant 0 : i32
    %c0_i32_1 = arith.constant 0 : i32
    return %arg0, %c0_i32, %c0_i32_0 : i32, i32, i32
  }
  func.func @transform_1(%arg0: i32) -> (i32, i32) {
    %c0_i32 = arith.constant 0 : i32
    %c0_i32_0 = arith.constant 0 : i32
    %c0_i32_1 = arith.constant 0 : i32
    return %c0_i32, %c0_i32_0 : i32, i32
  }
  func.func @transform_2(%arg0: i32) -> (i32, i32) {
    %c0_i32 = arith.constant 0 : i32
    %c0_i32_0 = arith.constant 0 : i32
    %c0_i32_1 = arith.constant 0 : i32
    return %c0_i32, %c0_i32_0 : i32, i32
  }
  func.func @transform_3(%arg0: i32) -> (i32, i32) {
    %c0_i32 = arith.constant 0 : i32
    %c0_i32_0 = arith.constant 0 : i32
    %c0_i32_1 = arith.constant 0 : i32
    return %c0_i32, %c0_i32_0 : i32, i32
  }
  func.func @transform_4(%arg0: i32) -> (i32, i32) {
    %c0_i32 = arith.constant 0 : i32
    %c0_i32_0 = arith.constant 0 : i32
    %c0_i32_1 = arith.constant 0 : i32
    return %c0_i32, %c0_i32_0 : i32, i32
  }
  func.func @transform_5(%arg0: i32) -> (i32, i32, i32) {
    %c0_i32 = arith.constant 0 : i32
    %c0_i32_0 = arith.constant 0 : i32
    %c0_i32_1 = arith.constant 0 : i32
    return %arg0, %c0_i32, %c0_i32_0 : i32, i32, i32
  }
}

</mosaic_0001>

<llo_original>
// kernel: a_call__.1
$region0: #{a_call__.1}
  #allocation0 [shape = 'u32[]', space=smem, size = 0x4, offset = 0x4, fixed_abs, tag = 'smem constant byte address 0x4 - core index']
  #allocation1 [shape = 'u32[144,128]{1,0:T(1,128)}', space=vmem, size = 0x12000, scoped, tag = 'internal scratch']
  #allocation2 [shape = 'bf16[72,256]{1,0:T(8,128)(2,1)}', space=vmem, size = 0x9000, scoped, tag = 'scratch operand']
  %s0 = inlined_call_operand.vmem [shape: f32[2,8,256], index: 0, kind: input, shape index: {}]
  %s1 = inlined_call_operand.vmem [shape: bf16[16,72], index: 1, kind: input, shape index: {}]
  %s2 = inlined_call_operand.vmem [shape: f32[9,256], index: 2, kind: input, shape index: {}]
  %s3 = inlined_call_operand.vmem [shape: f32[16,1], index: 3, kind: input, shape index: {}]
  %s4 = inlined_call_operand.vmem [shape: f32[16,1], index: 4, kind: input, shape index: {}]
  %s5 = inlined_call_operand.vmem [shape: f32[2,16,256], index: 5, kind: output, shape index: {}]
  %s6 = sld [smem:[#allocation0]]
  $region53: #{a_call__.1} parent=0
    _
  %s8 = ssub.s32 1, %s6
  %s9 = scalar_select 0, %s8, %s6
  loop: start=0, step=1, limit=4
  $region2: #{a_call__.1} parent=0 // loop_pre_header
    _
  $region3: #{a_call__.1} parent=0 // loop_header
    %s11 = sphi 0, %s15
    %p12 = scmp.ge.s32.totalorder %s11, 4
    %s21 = sphi 0, %s23
    %s24 = sphi 0, %s21
    %s25 = sphi 0, %s24
    %s41 = sphi 0, %s25
    %s45 = sphi 0, %s45
    %s47 = sphi 0, %s45
    %s48 = sphi 0, %s47
    %s62 = sphi 0, %s48
    %s66 = sphi 0, %s66
    %s68 = sphi 0, %s66
    %s69 = sphi 0, %s68
    %s83 = sphi 0, %s69
    %s87 = sphi 0, %s87
    %s89 = sphi 0, %s87
    %s90 = sphi 0, %s89
    %s104 = sphi 0, %s90
    %s108 = sphi 0, %s108
    %s110 = sphi 0, %s108
    %s111 = sphi 0, %s110
    %s125 = sphi 0, %s111
    %s131 = sphi 0, %s133
    %s134 = sphi 0, %s131
    %s135 = sphi 0, %s134
    %s151 = sphi 0, %s135
  $region4: #{a_call__.1} parent=0 // loop_header_branch
    %14 = sbr.rel (%p12) target = $region8
  $region5: #{a_call__.1} parent=0 // loop_body
    %s16 = ssub.s32 %s11, 1
    %s17 = ssub.s32 %s11, 2
    %s18 = sadd.s32 %s11, 1
    %s19 = ssub.s32 %s11, %s18
    %p20 = scmp.eq.s32.totalorder %s19, 0
    %s22 = sadd.s32 %s21, 1
    %s23 = scalar_select %p20, %s21, %s22
    %p26 = pneg %p20
    %p27 = scmp.eq.s32.totalorder %s11, 1
    %p28 = por %p26, %p27
    %p29 = scmp.ne.s32.totalorder %s21, %s24
    %p30 = scmp.eq.s32.totalorder %s11, 0
    %p31 = por %p29, %p30
    %p32 = scmp.ne.s32.totalorder %s21, %s24
    %p33 = scmp.eq.s32.totalorder %s16, 1
    %p34 = por %p32, %p33
    %p35 = scmp.ne.s32.totalorder %s24, %s25
    %p36 = scmp.eq.s32.totalorder %s16, 0
    %p37 = por %p35, %p36
    %p38 = scmp.ne.s32.totalorder %s24, %s25
    %p39 = scmp.eq.s32.totalorder %s17, 1
    %p40 = por %p38, %p39
    %p42 = scmp.ne.s32.totalorder %s25, %s41
    %p43 = scmp.eq.s32.totalorder %s17, 0
    %p44 = por %p42, %p43
    %s46 = sadd.s32 %s45, 1
    %p49 = scmp.eq.s32.totalorder %s11, 1
    %p50 = scmp.ne.s32.totalorder %s45, %s47
    %p51 = scmp.eq.s32.totalorder %s11, 0
    %p52 = por %p50, %p51
    %p53 = scmp.ne.s32.totalorder %s45, %s47
    %p54 = scmp.eq.s32.totalorder %s16, 1
    %p55 = por %p53, %p54
    %p56 = scmp.ne.s32.totalorder %s47, %s48
    %p57 = scmp.eq.s32.totalorder %s16, 0
    %p58 = por %p56, %p57
    %p59 = scmp.ne.s32.totalorder %s47, %s48
    %p60 = scmp.eq.s32.totalorder %s17, 1
    %p61 = por %p59, %p60
    %p63 = scmp.ne.s32.totalorder %s48, %s62
    %p64 = scmp.eq.s32.totalorder %s17, 0
    %p65 = por %p63, %p64
    %s67 = sadd.s32 %s66, 1
    %p70 = scmp.eq.s32.totalorder %s11, 1
    %p71 = scmp.ne.s32.totalorder %s66, %s68
    %p72 = scmp.eq.s32.totalorder %s11, 0
    %p73 = por %p71, %p72
    %p74 = scmp.ne.s32.totalorder %s66, %s68
    %p75 = scmp.eq.s32.totalorder %s16, 1
    %p76 = por %p74, %p75
    %p77 = scmp.ne.s32.totalorder %s68, %s69
    %p78 = scmp.eq.s32.totalorder %s16, 0
    %p79 = por %p77, %p78
    %p80 = scmp.ne.s32.totalorder %s68, %s69
    %p81 = scmp.eq.s32.totalorder %s17, 1
    %p82 = por %p80, %p81
    %p84 = scmp.ne.s32.totalorder %s69, %s83
    %p85 = scmp.eq.s32.totalorder %s17, 0
    %p86 = por %p84, %p85
    %s88 = sadd.s32 %s87, 1
    %p91 = scmp.eq.s32.totalorder %s11, 1
    %p92 = scmp.ne.s32.totalorder %s87, %s89
    %p93 = scmp.eq.s32.totalorder %s11, 0
    %p94 = por %p92, %p93
    %p95 = scmp.ne.s32.totalorder %s87, %s89
    %p96 = scmp.eq.s32.totalorder %s16, 1
    %p97 = por %p95, %p96
    %p98 = scmp.ne.s32.totalorder %s89, %s90
    %p99 = scmp.eq.s32.totalorder %s16, 0
    %p100 = por %p98, %p99
    %p101 = scmp.ne.s32.totalorder %s89, %s90
    %p102 = scmp.eq.s32.totalorder %s17, 1
    %p103 = por %p101, %p102
    %p105 = scmp.ne.s32.totalorder %s90, %s104
    %p106 = scmp.eq.s32.totalorder %s17, 0
    %p107 = por %p105, %p106
    %s109 = sadd.s32 %s108, 1
    %p112 = scmp.eq.s32.totalorder %s11, 1
    %p113 = scmp.ne.s32.totalorder %s108, %s110
    %p114 = scmp.eq.s32.totalorder %s11, 0
    %p115 = por %p113, %p114
    %p116 = scmp.ne.s32.totalorder %s108, %s110
    %p117 = scmp.eq.s32.totalorder %s16, 1
    %p118 = por %p116, %p117
    %p119 = scmp.ne.s32.totalorder %s110, %s111
    %p120 = scmp.eq.s32.totalorder %s16, 0
    %p121 = por %p119, %p120
    %p122 = scmp.ne.s32.totalorder %s110, %s111
    %p123 = scmp.eq.s32.totalorder %s17, 1
    %p124 = por %p122, %p123
    %p126 = scmp.ne.s32.totalorder %s111, %s125
    %p127 = scmp.eq.s32.totalorder %s17, 0
    %p128 = por %p126, %p127
    %s129 = ssub.s32 %s11, %s18
    %p130 = scmp.eq.s32.totalorder %s129, 0
    %s132 = sadd.s32 %s131, 1
    %s133 = scalar_select %p130, %s131, %s132
    %p136 = pneg %p130
    %p137 = scmp.eq.s32.totalorder %s11, 1
    %p138 = por %p136, %p137
    %p139 = scmp.ne.s32.totalorder %s131, %s134
    %p140 = scmp.eq.s32.totalorder %s11, 0
    %p141 = por %p139, %p140
    %p142 = scmp.ne.s32.totalorder %s131, %s134
    %p143 = scmp.eq.s32.totalorder %s16, 1
    %p144 = por %p142, %p143
    %p145 = scmp.ne.s32.totalorder %s134, %s135
    %p146 = scmp.eq.s32.totalorder %s16, 0
    %p147 = por %p145, %p146
    %p148 = scmp.ne.s32.totalorder %s134, %s135
    %p149 = scmp.eq.s32.totalorder %s17, 1
    %p150 = por %p148, %p149
    %p152 = scmp.ne.s32.totalorder %s135, %s151
    %p153 = scmp.eq.s32.totalorder %s17, 0
    %p154 = por %p152, %p153
    %p155 = scmp.le.s32.totalorder 1, %s11
    %p156 = scmp.lt.s32.totalorder %s11, 3
    %p157 = pnand %p155, %p156
    %p158 = pneg %p157
    // Predicated region
    $region9: #{a_call__.1} parent=5 // pred_check
      _
    $region10: #{a_call__.1} parent=5 // pred_check_branch
      %160 = sbr.rel (%p157) target = $region12
    $region11: #{a_call__.1} parent=5 // pred_region
      %s161 = ssub.s32 %s11, 1
      // Predicated region
      $region13: #{a_call__.1} parent=11 // pred_check
        %p162 = pneg %p58
      $region14: #{a_call__.1} parent=11 // pred_check_branch
        %164 = sbr.rel (%p162) target = $region16
      $region15: #{a_call__.1} parent=11 // pred_region
        _
      $region16: #{a_call__.1} parent=11 // pred_fallthru
        _
      // Predicated region
      $region17: #{a_call__.1} parent=11 // pred_check
        %p165 = pneg %p79
      $region18: #{a_call__.1} parent=11 // pred_check_branch
        %167 = sbr.rel (%p165) target = $region20
      $region19: #{a_call__.1} parent=11 // pred_region
        _
      $region20: #{a_call__.1} parent=11 // pred_fallthru
        _
      // Predicated region
      $region21: #{a_call__.1} parent=11 // pred_check
        %p168 = pneg %p100
      $region22: #{a_call__.1} parent=11 // pred_check_branch
        %170 = sbr.rel (%p168) target = $region24
      $region23: #{a_call__.1} parent=11 // pred_region
        _
      $region24: #{a_call__.1} parent=11 // pred_fallthru
        _
      // Predicated region
      $region25: #{a_call__.1} parent=11 // pred_check
        %p171 = pneg %p121
      $region26: #{a_call__.1} parent=11 // pred_check_branch
        %173 = sbr.rel (%p171) target = $region28
      $region27: #{a_call__.1} parent=11 // pred_region
        _
      $region28: #{a_call__.1} parent=11 // pred_fallthru
        _
    $region12: #{a_call__.1} parent=5 // pred_fallthru
      _
    %p174 = scmp.lt.s32.totalorder %s11, 2
    // Predicated region
    $region29: #{a_call__.1} parent=5 // pred_check
      %p175 = pneg %p174
    $region30: #{a_call__.1} parent=5 // pred_check_branch
      %177 = sbr.rel (%p175) target = $region32
    $region31: #{a_call__.1} parent=5 // pred_region
      // Predicated region
      $region33: #{a_call__.1} parent=31 // pred_check
        %p178 = pneg %p31
      $region34: #{a_call__.1} parent=31 // pred_check_branch
        %180 = sbr.rel (%p178) target = $region36
      $region35: #{a_call__.1} parent=31 // pred_region
        %p181 = scmp.lt.s32.totalorder %s11, 1
        %s182 = scalar_select %p181, %s11, 1
        %s183 = smul.addr %s182, 2
        %s184 = smul.addr %s183, 8
        %s185 = scalar_lea.vmem %s0, %s184
      $region36: #{a_call__.1} parent=31 // pred_fallthru
        _
    $region32: #{a_call__.1} parent=5 // pred_fallthru
      _
    %p186 = scmp.le.s32.totalorder 1, %s11
    %p187 = scmp.lt.s32.totalorder %s11, 3
    %p188 = pnand %p186, %p187
    %p189 = pneg %p188
    // Predicated region
    $region37: #{a_call__.1} parent=5 // pred_check
      _
    $region38: #{a_call__.1} parent=5 // pred_check_branch
      %191 = sbr.rel (%p188) target = $region40
    $region39: #{a_call__.1} parent=5 // pred_region
      %s192 = ssub.s32 %s11, 1
      %p193 = scmp.lt.s32.totalorder %s16, 1
      %s194 = scalar_select %p193, %s16, 1
      %s195 = smul.addr %s194, 2
      %s196 = smul.addr %s195, 8
      %s197 = scalar_lea.vmem %s0, %s196
      %p198 = pneg %p37
      %p199 = pneg %p34
      %p200 = pneg %p58
      %p201 = pneg %p55
      %p202 = pneg %p79
      %p203 = pneg %p76
      %p204 = pneg %p100
      %p205 = pneg %p97
      %p206 = pneg %p121
      %p207 = pneg %p118
      %p208 = pneg %p147
      %p209 = pneg %p144
      %p210 = scmp.lt.s32.totalorder %s16, 1
      %s211 = scalar_select %p210, %s16, 1
      %s212 = smul.addr %s211, 4
      %s213 = smul.addr %s212, 8
      %s214 = scalar_lea.vmem %s5, %s213
      %p215 = scmp.lt.s32.totalorder %s16, 1
      %s216 = scalar_select %p215, %s16, 1
      %s217 = smul.addr %s216, 2
      %s218 = smul.addr %s217, 8
      %s219 = scalar_lea.vmem %s0, %s218
      %p220 = scmp.lt.s32.totalorder %s16, 1
      %s221 = scalar_select %p220, %s16, 1
      %s222 = smul.addr %s221, 4
      %s223 = smul.addr %s222, 8
      %s224 = scalar_lea.vmem %s5, %s223
      %v226 = vld [vmem:[%s219] sm:$0xff]
      %v227 = vld [vmem:[%s219 + $0x8] sm:$0xff]
      %228 = vrot.lane.b32.xlu0 %v226, 17
      %v229 = vpop.permute.xlu0 %228
      %230 = vrot.lane.b32.xlu0 %v227, 17
      %v231 = vpop.permute.xlu0 %230
      %v232 = vlaneseq
      %v233 = vand.u32 %v232, 127
      %vm234 = vcmp.lt.s32.totalorder %v233, 17
      %v235 = vsel %vm234, %v229, %v231
      %v236 = vsel %vm234, %v231, %v229
      %v237 = vld [vmem:[%s2] ss:$8 sm:$0x3]
      %v239 = vlaneseq
      %v240 = vshrl.u32 %v239, 7
      %v241 = vsub.s32 0, %v240
      %v242 = vrot.slane %v237, %v241
      %v243 = vlaneseq
      %v244 = vshrl.u32 %v243, 7
      %v245 = vsub.s32 1, %v244
      %v246 = vrot.slane %v237, %v245
      %v249 = vmul.f32 %v236, %v242
      %v250 = vmul.f32 %v235, %v246
      %251 = vrot.lane.b32.xlu0 %v226, 16
      %v252 = vpop.permute.xlu0 %251
      %253 = vrot.lane.b32.xlu0 %v227, 16
      %v254 = vpop.permute.xlu0 %253
      %vm255 = vcmp.lt.s32.totalorder %v233, 16
      %v256 = vsel %vm255, %v252, %v254
      %v257 = vsel %vm255, %v254, %v252
      %s258 = scalar_lea.vmem %s2, 1
      %v259 = vld [vmem:[%s258] ss:$8 sm:$0x3]
      %v261 = vlaneseq
      %v262 = vshrl.u32 %v261, 7
      %v263 = vsub.s32 0, %v262
      %v264 = vrot.slane %v259, %v263
      %v265 = vlaneseq
      %v266 = vshrl.u32 %v265, 7
      %v267 = vsub.s32 1, %v266
      %v268 = vrot.slane %v259, %v267
      %v271 = vmul.f32 %v257, %v264
      %v272 = vmul.f32 %v256, %v268
      %273 = vrot.lane.b32.xlu0 %v226, 15
      %v274 = vpop.permute.xlu0 %273
      %275 = vrot.lane.b32.xlu0 %v227, 15
      %v276 = vpop.permute.xlu0 %275
      %vm277 = vcmp.lt.s32.totalorder %v233, 15
      %v278 = vsel %vm277, %v274, %v276
      %v279 = vsel %vm277, %v276, %v274
      %s280 = scalar_lea.vmem %s2, 2
      %v281 = vld [vmem:[%s280] ss:$8 sm:$0x3]
      %v283 = vlaneseq
      %v284 = vshrl.u32 %v283, 7
      %v285 = vsub.s32 0, %v284
      %v286 = vrot.slane %v281, %v285
      %v287 = vlaneseq
      %v288 = vshrl.u32 %v287, 7
      %v289 = vsub.s32 1, %v288
      %v290 = vrot.slane %v281, %v289
      %v293 = vmul.f32 %v279, %v286
      %v294 = vmul.f32 %v278, %v290
      %295 = vrot.lane.b32.xlu0 %v226, 1
      %v296 = vpop.permute.xlu0 %295
      %297 = vrot.lane.b32.xlu0 %v227, 1
      %v298 = vpop.permute.xlu0 %297
      %vm299 = vcmp.lt.s32.totalorder %v233, 1
      %v300 = vsel %vm299, %v296, %v298
      %v301 = vsel %vm299, %v298, %v296
      %s302 = scalar_lea.vmem %s2, 3
      %v303 = vld [vmem:[%s302] ss:$8 sm:$0x3]
      %v305 = vlaneseq
      %v306 = vshrl.u32 %v305, 7
      %v307 = vsub.s32 0, %v306
      %v308 = vrot.slane %v303, %v307
      %v309 = vlaneseq
      %v310 = vshrl.u32 %v309, 7
      %v311 = vsub.s32 1, %v310
      %v312 = vrot.slane %v303, %v311
      %v315 = vmul.f32 %v301, %v308
      %v316 = vmul.f32 %v300, %v312
      %317 = vrot.lane.b32.xlu0 %v226, 127
      %v318 = vpop.permute.xlu0 %317
      %319 = vrot.lane.b32.xlu0 %v227, 127
      %v320 = vpop.permute.xlu0 %319
      %vm321 = vcmp.lt.s32.totalorder %v233, 127
      %v322 = vsel %vm321, %v318, %v320
      %v323 = vsel %vm321, %v320, %v318
      %s324 = scalar_lea.vmem %s2, 5
      %v325 = vld [vmem:[%s324] ss:$8 sm:$0x3]
      %v327 = vlaneseq
      %v328 = vshrl.u32 %v327, 7
      %v329 = vsub.s32 0, %v328
      %v330 = vrot.slane %v325, %v329
      %v331 = vlaneseq
      %v332 = vshrl.u32 %v331, 7
      %v333 = vsub.s32 1, %v332
      %v334 = vrot.slane %v325, %v333
      %v337 = vmul.f32 %v322, %v330
      %v338 = vmul.f32 %v323, %v334
      %339 = vrot.lane.b32.xlu0 %v226, 113
      %v340 = vpop.permute.xlu0 %339
      %341 = vrot.lane.b32.xlu0 %v227, 113
      %v342 = vpop.permute.xlu0 %341
      %vm343 = vcmp.lt.s32.totalorder %v233, 113
      %v344 = vsel %vm343, %v340, %v342
      %v345 = vsel %vm343, %v342, %v340
      %s346 = scalar_lea.vmem %s2, 6
      %v347 = vld [vmem:[%s346] ss:$8 sm:$0x3]
      %v349 = vlaneseq
      %v350 = vshrl.u32 %v349, 7
      %v351 = vsub.s32 0, %v350
      %v352 = vrot.slane %v347, %v351
      %v353 = vlaneseq
      %v354 = vshrl.u32 %v353, 7
      %v355 = vsub.s32 1, %v354
      %v356 = vrot.slane %v347, %v355
      %v359 = vmul.f32 %v344, %v352
      %v360 = vmul.f32 %v345, %v356
      %361 = vrot.lane.b32.xlu0 %v226, 112
      %v362 = vpop.permute.xlu0 %361
      %363 = vrot.lane.b32.xlu0 %v227, 112
      %v364 = vpop.permute.xlu0 %363
      %vm365 = vcmp.lt.s32.totalorder %v233, 112
      %v366 = vsel %vm365, %v362, %v364
      %v367 = vsel %vm365, %v364, %v362
      %s368 = scalar_lea.vmem %s2, 7
      %v369 = vld [vmem:[%s368] ss:$8 sm:$0x3]
      %v371 = vlaneseq
      %v372 = vshrl.u32 %v371, 7
      %v373 = vsub.s32 0, %v372
      %v374 = vrot.slane %v369, %v373
      %v375 = vlaneseq
      %v376 = vshrl.u32 %v375, 7
      %v377 = vsub.s32 1, %v376
      %v378 = vrot.slane %v369, %v377
      %v381 = vmul.f32 %v366, %v374
      %v382 = vmul.f32 %v367, %v378
      %383 = vrot.lane.b32.xlu0 %v226, 111
      %v384 = vpop.permute.xlu0 %383
      %385 = vrot.lane.b32.xlu0 %v227, 111
      %v386 = vpop.permute.xlu0 %385
      %vm387 = vcmp.lt.s32.totalorder %v233, 111
      %v388 = vsel %vm387, %v384, %v386
      %v389 = vsel %vm387, %v386, %v384
      %s390 = scalar_lea.vmem %s2, 16
      %v391 = vld [vmem:[%s390] ss:$8 sm:$0x3]
      %v393 = vlaneseq
      %v394 = vshrl.u32 %v393, 7
      %v395 = vsub.s32 0, %v394
      %v396 = vrot.slane %v391, %v395
      %v397 = vlaneseq
      %v398 = vshrl.u32 %v397, 7
      %v399 = vsub.s32 1, %v398
      %v400 = vrot.slane %v391, %v399
      %v403 = vmul.f32 %v388, %v396
      %v404 = vmul.f32 %v389, %v400
      %v405 = vpack.c.bf16 %v271, %v249
      %v406 = vpack.c.bf16 %v272, %v250
      %v407 = vpack.c.bf16 %v315, %v293
      %v408 = vpack.c.bf16 %v316, %v294
      %v409 = vpack.c.bf16 %v337, %v226
      %v410 = vpack.c.bf16 %v338, %v227
      %v411 = vpack.c.bf16 %v381, %v359
      %v412 = vpack.c.bf16 %v382, %v360
      %v413 = vpack.c.bf16 %v403, %v403
      %v414 = vpack.c.bf16 %v404, %v404
      %v425 = vunpack.c.l.b16 %v405
      %v426 = vunpack.c.l.b16 %v406
      %v427 = vunpack.c.h.b16 %v405
      %v428 = vunpack.c.h.b16 %v406
      %v429 = vunpack.c.l.b16 %v407
      %v430 = vunpack.c.l.b16 %v408
      %v431 = vunpack.c.h.b16 %v407
      %v432 = vunpack.c.h.b16 %v408
      %v433 = vunpack.c.l.b16 %v409
      %v434 = vunpack.c.l.b16 %v410
      %v435 = vunpack.c.h.b16 %v409
      %v436 = vunpack.c.h.b16 %v410
      %v437 = vunpack.c.l.b16 %v411
      %v438 = vunpack.c.l.b16 %v412
      %v439 = vunpack.c.h.b16 %v411
      %v440 = vunpack.c.h.b16 %v412
      %v441 = vunpack.c.l.b16 %v413
      %v442 = vunpack.c.l.b16 %v414
      %v443 = vpack.c.b16 %v426, %v425
      %v444 = vpack.c.b16 %v428, %v427
      %v445 = vpack.c.b16 %v430, %v429
      %v446 = vpack.c.b16 %v432, %v431
      %v447 = vpack.c.b16 %v434, %v433
      %v448 = vpack.c.b16 %v436, %v435
      %v449 = vpack.c.b16 %v438, %v437
      %v450 = vpack.c.b16 %v440, %v439
      %v451 = vpack.c.b16 %v442, %v441
      %461 = vst [vmem:[#allocation2] sm:$0xff] %v443
      %462 = vst [vmem:[#allocation2 + $0x8] sm:$0xff] %v444
      %463 = vst [vmem:[#allocation2 + $0x10] sm:$0xff] %v445
      %464 = vst [vmem:[#allocation2 + $0x18] sm:$0xff] %v446
      %465 = vst [vmem:[#allocation2 + $0x20] sm:$0xff] %v447
      %466 = vst [vmem:[#allocation2 + $0x28] sm:$0xff] %v448
      %467 = vst [vmem:[#allocation2 + $0x30] sm:$0xff] %v449
      %468 = vst [vmem:[#allocation2 + $0x38] sm:$0xff] %v450
      %469 = vst [vmem:[#allocation2 + $0x40] sm:$0xff] %v451
      %v470 = vld [vmem:[%s1] sm:$0xf]
      %v471 = vld [vmem:[%s1 + $0x4] sm:$0xf]
      %v472 = vld [vmem:[#allocation2] sm:$0xff]
      %v473 = vld [vmem:[#allocation2 + $0x8] sm:$0xff]
      %v474 = vld [vmem:[#allocation2 + $0x10] sm:$0xff]
      %v475 = vld [vmem:[#allocation2 + $0x18] sm:$0xff]
      %v476 = vld [vmem:[#allocation2 + $0x20] sm:$0xff]
      %v477 = vld [vmem:[#allocation2 + $0x28] sm:$0xff]
      %v478 = vld [vmem:[#allocation2 + $0x30] sm:$0xff]
      %v479 = vld [vmem:[#allocation2 + $0x38] sm:$0xff]
      %v480 = vld [vmem:[#allocation2 + $0x40] sm:$0xff]
      %v483 = vunpack.c.l.b16 %v470
      %v484 = vunpack.c.l.b16 %v471
      %v485 = vpack.c.b16 %v484, %v483
      %v495 = vunpack.c.l.b16 %v472
      %v496 = vunpack.c.h.b16 %v472
      %v497 = vunpack.c.l.b16 %v473
      %v498 = vunpack.c.h.b16 %v473
      %v499 = vunpack.c.l.b16 %v474
      %v500 = vunpack.c.h.b16 %v474
      %v501 = vunpack.c.l.b16 %v475
      %v502 = vunpack.c.h.b16 %v475
      %v503 = vunpack.c.l.b16 %v476
      %v504 = vunpack.c.h.b16 %v476
      %v505 = vunpack.c.l.b16 %v477
      %v506 = vunpack.c.h.b16 %v477
      %v507 = vunpack.c.l.b16 %v478
      %v508 = vunpack.c.h.b16 %v478
      %v509 = vunpack.c.l.b16 %v479
      %v510 = vunpack.c.h.b16 %v479
      %v511 = vunpack.c.l.b16 %v480
      %v512 = vunpack.c.h.b16 %v480
      %v513 = vpack.c.b16 %v497, %v495
      %v514 = vpack.c.b16 %v498, %v496
      %v515 = vpack.c.b16 %v501, %v499
      %v516 = vpack.c.b16 %v502, %v500
      %v517 = vpack.c.b16 %v505, %v503
      %v518 = vpack.c.b16 %v506, %v504
      %v519 = vpack.c.b16 %v509, %v507
      %v520 = vpack.c.b16 %v510, %v508
      %v521 = vpack.c.b16 %v511, %v511
      %v522 = vpack.c.b16 %v512, %v512
      %vm531 = vcmask 588800
      %v533 = vsel %vm531, %v485, 0
      %vm535 = vcmask 1043456
      %v537 = vsel %vm535, %v521, 0
      %v540 = vsel %vm535, %v522, 0
      %542 = vmatprep.subr.bf16.mxu0 %v514
      %543 = vmatpush1.bf16.msra.mxu0 %v513
      %544 = vmatprep.subr.bf16.mxu0 %v516
      %545 = vmatpush1.bf16.msra.mxu0 %v515
      %546 = vmatprep.subr.bf16.mxu0 %v518
      %547 = vmatpush1.bf16.msra.mxu0 %v517
      %548 = vmatprep.subr.bf16.mxu0 %v520
      %549 = vmatpush1.bf16.msra.mxu0 %v519
      %550 = vmatprep.subr.bf16.mxu0 %v540
      %551 = vmatpush1.bf16.msra.mxu0 %v537
      %552 = vmatprep.subr.bf16.mxu0 0
      %553 = vmatpush1.bf16.msra.mxu0 0
      %554 = vmatprep.subr.bf16.mxu0 0
      %555 = vmatpush1.bf16.msra.mxu0 0
      %556 = vmatprep.subr.bf16.mxu0 0
      %557 = vmatpush1.bf16.msra.mxu0 0
      %558 = vmatprep.subr.bf16.mxu0 0
      %559 = vmatpush1.bf16.msra.mxu0 0
      %560 = vmatprep.subr.bf16.mxu0 0
      %561 = vmatpush1.bf16.msra.mxu0 0
      %562 = vmatprep.subr.bf16.mxu0 0
      %563 = vmatpush1.bf16.msra.mxu0 0
      %564 = vmatprep.subr.bf16.mxu0 0
      %565 = vmatpush1.bf16.msra.mxu0 0
      %566 = vmatprep.subr.bf16.mxu0 0
      %567 = vmatpush1.bf16.msra.mxu0 0
      %568 = vmatprep.subr.bf16.mxu0 0
      %569 = vmatpush1.bf16.msra.mxu0 0
      %570 = vmatprep.subr.bf16.mxu0 0
      %571 = vmatpush1.bf16.msra.mxu0 0
      %572 = vmatprep.subr.bf16.mxu0 0
      %573 = vmatpush1.bf16.msra.mxu0 0
      %574 = vmatprep.mubr.bf16.mxu0 0
      %575 = vmatmul.mubr.bf16.gmra.mrb[0].mxu0 %v533
      %v576 = vpop.f32.mrb[0].mxu0
      %v577 = vadd.f32 0.0, %v576
      %v578 = vpop.f32.mrb[0].mxu0
      %v579 = vadd.f32 0.0, %v578
      %v580 = vpop.f32.mrb[0].mxu0
      %v581 = vadd.f32 0.0, %v580
      %v582 = vpop.f32.mrb[0].mxu0
      %v583 = vadd.f32 0.0, %v582
      %584 = vdwg.mxu0
      %v585 = vadd.f32 %v577, %v579
      %586 = vadd.xlane.f32.xlu0 %v585
      %v587 = vpop.xlane.xlu0 %586
      %v588 = vadd.f32 %v581, %v583
      %589 = vadd.xlane.f32.xlu0 %v588
      %v590 = vpop.xlane.xlu0 %589
      %v591 = vrcp.pop 256.0
      %v592 = vmul.f32 %v587, %v591
      %v593 = vmul.f32 %v590, %v591
      %v594 = vsub.f32 %v577, %v592
      %v595 = vsub.f32 %v579, %v592
      %v596 = vsub.f32 %v581, %v593
      %v597 = vsub.f32 %v583, %v593
      %v598 = vmul.f32 %v594, %v594
      %v599 = vmul.f32 %v595, %v595
      %v600 = vmul.f32 %v596, %v596
      %v601 = vmul.f32 %v597, %v597
      %v602 = vadd.f32 %v598, %v599
      %603 = vadd.xlane.f32.xlu0 %v602
      %v604 = vpop.xlane.xlu0 %603
      %v605 = vadd.f32 %v600, %v601
      %606 = vadd.xlane.f32.xlu0 %v605
      %v607 = vpop.xlane.xlu0 %606
      %v608 = vmul.f32 %v604, %v591
      %v609 = vmul.f32 %v607, %v591
      %v610 = vld [vmem:[%s3] sm:$0xff]
      %v611 = vld [vmem:[%s3 + $0x8] sm:$0xff]
      %v612 = vadd.f32 %v608, 1e-05
      %v613 = vadd.f32 %v609, 1e-05
      %v614 = vrsqrt.pop %v612
      %v615 = vrsqrt.pop %v613
      %v616 = vmul.f32 %v610, %v614
      %v617 = vmul.f32 %v611, %v615
      %619 = vset.pattern.permute.xlu0 0
      %620 = vperm.xlu0 %619, %v616
      %v621 = vpop.permute.xlu0 %620
      %624 = vset.pattern.permute.xlu0 0
      %625 = vperm.xlu0 %624, %v617
      %v626 = vpop.permute.xlu0 %625
      %v628 = vmul.f32 %v594, %v621
      %v629 = vmul.f32 %v595, %v621
      %v630 = vmul.f32 %v596, %v626
      %v631 = vmul.f32 %v597, %v626
      %v632 = vld [vmem:[%s4] sm:$0xff]
      %v633 = vld [vmem:[%s4 + $0x8] sm:$0xff]
      %635 = vset.pattern.permute.xlu0 0
      %636 = vperm.xlu0 %635, %v632
      %v637 = vpop.permute.xlu0 %636
      %640 = vset.pattern.permute.xlu0 0
      %641 = vperm.xlu0 %640, %v633
      %v642 = vpop.permute.xlu0 %641
      %v644 = vadd.f32 %v628, %v637
      %v645 = vadd.f32 %v629, %v637
      %v646 = vadd.f32 %v630, %v642
      %v647 = vadd.f32 %v631, %v642
      %v648 = vmax.f32 %v644, 0.0
      %v649 = vmax.f32 %v645, 0.0
      %v650 = vmax.f32 %v646, 0.0
      %v651 = vmax.f32 %v647, 0.0
      %652 = vst [vmem:[%s224] sm:$0xff] %v648
      %653 = vst [vmem:[%s224 + $0x8] sm:$0xff] %v649
      %654 = vst [vmem:[%s224 + $0x10] sm:$0xff] %v650
      %655 = vst [vmem:[%s224 + $0x18] sm:$0xff] %v651
      %p656 = scmp.lt.s32.totalorder %s16, 1
      %s657 = scalar_select %p656, %s16, 1
      %s658 = smul.addr %s657, 4
      %s659 = smul.addr %s658, 8
      %s660 = scalar_lea.vmem %s5, %s659
      // Predicated region
      $region41: #{a_call__.1} parent=39 // pred_check
        %p661 = pneg %p144
      $region42: #{a_call__.1} parent=39 // pred_check_branch
        %663 = sbr.rel (%p661) target = $region44
      $region43: #{a_call__.1} parent=39 // pred_region
        _
      $region44: #{a_call__.1} parent=39 // pred_fallthru
        _
    $region40: #{a_call__.1} parent=5 // pred_fallthru
      _
    %p664 = scmp.le.s32.totalorder 2, %s11
    // Predicated region
    $region45: #{a_call__.1} parent=5 // pred_check
      %p665 = pneg %p664
    $region46: #{a_call__.1} parent=5 // pred_check_branch
      %667 = sbr.rel (%p665) target = $region48
    $region47: #{a_call__.1} parent=5 // pred_region
      %s668 = ssub.s32 %s11, 2
      // Predicated region
      $region49: #{a_call__.1} parent=47 // pred_check
        %p669 = pneg %p150
      $region50: #{a_call__.1} parent=47 // pred_check_branch
        %671 = sbr.rel (%p669) target = $region52
      $region51: #{a_call__.1} parent=47 // pred_region
        %p672 = scmp.lt.s32.totalorder %s17, 1
        %s673 = scalar_select %p672, %s17, 1
        %s674 = smul.addr %s673, 4
        %s675 = smul.addr %s674, 8
        %s676 = scalar_lea.vmem %s5, %s675
      $region52: #{a_call__.1} parent=47 // pred_fallthru
        _
    $region48: #{a_call__.1} parent=5 // pred_fallthru
      _
  $region6: #{a_call__.1} parent=0 // loop_footer
    %s15 = sadd.s32 1, %s11
  $region7: #{a_call__.1} parent=0 // loop_footer_branch
    %10 = sbr.rel target = $region3
  $region8: #{a_call__.1} parent=0 // loop_exit
    _

</llo_original>
